<compile_context>
chip_gen: v5e
topology: v5e:2x2
jax: 0.10.0
libtpu: 0.0.40
codegen_flags: <defaults>
</compile_context>

<pallas_src>
import jax
import jax.numpy as jnp
from jax.experimental import pallas as pl
from jax.experimental.pallas import tpu as pltpu

BG = -10000.0  # background_color used by the PyTorch renderer


# ---------------------------------------------------------------------------
# VMEM-aware tile sizing
# ---------------------------------------------------------------------------
def _vmem_limit_bytes():
    """Scoped-VMEM limit to request: well above the 16/32 MiB defaults but
    conservative w.r.t. physical VMEM (64 MiB on v7x, 128 MiB on v5e/v6e)."""
    try:
        cap = int(pltpu.get_tpu_info().vmem_capacity_bytes)
    except Exception:
        cap = 64 * 1024 * 1024  # conservative fallback (v7x physical VMEM)
    return int(min(cap * 3 // 4, 100 * 1024 * 1024))


def _pick_tile(extent, quantum, bytes_per_unit, max_bytes):
    """Largest multiple of `quantum` dividing `extent` whose resident footprint
    (bytes_per_unit per row, double-buffering already included by the caller)
    fits `max_bytes`; falls back to the full extent / smallest divisor."""
    cands = [t for t in range(quantum, extent + 1, quantum) if extent % t == 0]
    if not cands:
        return extent
    fitting = [t for t in cands if t * bytes_per_unit <= max_bytes]
    return max(fitting) if fitting else min(cands)


# ---------------------------------------------------------------------------
# Kernel 1: canonical point map  (reduction over the k=2 view axis)
# ---------------------------------------------------------------------------
def _canon_kernel(ptmps_ref, conf_ref, canon_ref):
    # ptmps_ref: (1, 2, 3, T, L), conf_ref: (1, 2, T, L), canon_ref: (1, 3, T, L)
    c0 = conf_ref[0, 0] - 0.999                       # (T, L)
    c1 = conf_ref[0, 1] - 0.999                       # (T, L)
    # NOTE: like the PyTorch reference, this yields Inf/NaN if sum(conf-0.999)<=0.
    inv = 1.0 / (c0 + c1)                             # one divide per pixel
    for ch in range(3):                               # static unroll, 2-D ops only
        canon_ref[0, ch] = (ptmps_ref[0, 0, ch] * c0
                            + ptmps_ref[0, 1, ch] * c1) * inv


def canonical_point_map(ptmps_cf, conf, *, tile=None):
    """ptmps_cf: (B, 2, 3, H, W) f32 channels-first point maps (as the DUSt3R
    producer should emit them), conf: (B, 2, H, W) f32.  Returns (B, 3, H, W)."""
    B, K, THREE, H, W = ptmps_cf.shape
    assert K == 2 and THREE == 3
    vmem_limit = _vmem_limit_bytes()
    budget = int(0.6 * vmem_limit)

    if (H * W) % 128 == 0:
        # Lane-dense flat spatial layout (free reshape for contiguous inputs):
        # every load/store is full-lane, never masked.
        rows, lanes = (H * W) // 128, 128
        p = ptmps_cf.reshape(B, 2, 3, rows, lanes)
        c = conf.reshape(B, 2, rows, lanes)
    else:
        rows, lanes = H, W          # fallback: (H, W) tiling (W may be lane-masked)
        p, c = ptmps_cf, conf

    per_row = 2 * (2 * 3 + 2 + 3) * lanes * 4         # double-buffered blocks / row
    t = tile if tile is not None else _pick_tile(rows, 8, per_row, budget)
    assert rows % t == 0

    out = pl.pallas_call(
        _canon_kernel,
        out_shape=jax.ShapeDtypeStruct((B, 3, rows, lanes), jnp.float32),
        grid=(B, rows // t),
        in_specs=[
            pl.BlockSpec((1, 2, 3, t, lanes), lambda b, r: (b, 0, 0, r, 0)),
            pl.BlockSpec((1, 2, t, lanes), lambda b, r: (b, 0, r, 0)),
        ],
        out_specs=pl.BlockSpec((1, 3, t, lanes), lambda b, r: (b, 0, r, 0)),
        compiler_params=pltpu.CompilerParams(
            dimension_semantics=("parallel", "parallel"),
            vmem_limit_bytes=vmem_limit,
        ),
    )(p, c)
    return out.reshape(B, 3, H, W)


# ---------------------------------------------------------------------------
# Kernel 2: MEt3R score from rendered feature maps
#   rendering layout: (B, 2, H, C, W)  -- channels on sublanes, W on lanes
# ---------------------------------------------------------------------------
def _met3r_kernel(rend_ref, nd_ref, *map_refs):
    # rend_ref: (1, 2, TH, C, W) f32/bf16; nd_ref: (1, 1, 1, 128) f32 resident
    # accumulator (lane 0: sum(dissim*mask), lane 1: sum(mask));
    # map_refs (optional): mask (1, TH, W), dissim (1, TH, W).
    h = pl.program_id(2)

    @pl.when(h == 0)
    def _init():
        nd_ref[...] = jnp.zeros_like(nd_ref)

    bg = jnp.asarray(BG, dtype=rend_ref.dtype)
    zero = jnp.asarray(0, dtype=rend_ref.dtype)
    r0n = rend_ref[0, 0]                               # (TH, C, W)  "ood" view
    r1n = rend_ref[0, 1]                               # (TH, C, W)  "train" view

    # Background test in the native dtype (a bf16 producer's rounded BG sentinel
    # still compares equal).  Full per-channel check kept to match the reference.
    bg0 = r0n == bg
    bg1 = r1n == bg

    # Fused overlap mask: single sublane-axis reduction instead of two
    # cross-lane reductions + a multiply.
    bad = jnp.logical_or(bg0, bg1).astype(jnp.float32)          # (TH, C, W)
    mask = 1.0 - jnp.max(bad, axis=1)                           # (TH, W)

    # Native-dtype select for background zeroing, then f32 accumulation
    # (v5e has no bf16 VPU; sums must be f32 anyway).
    r0 = jnp.where(bg0, zero, r0n).astype(jnp.float32)
    r1 = jnp.where(bg1, zero, r1n).astype(jnp.float32)

    # Sum-over-C = sublane-axis reductions (VALU adds + one 8-wide reduce),
    # results are already W-lane-dense.
    dot = jnp.sum(r1 * r0, axis=1)                              # (TH, W)
    s0 = jnp.sum(r0 * r0, axis=1)
    s1 = jnp.sum(r1 * r1, axis=1)
    denom = jnp.sqrt(s0 * s1) + 0.001                           # one sqrt, not two

    if map_refs:
        # Maps are consumed downstream: exact divide for the stored dissim.
        mask_ref, dissim_ref = map_refs
        dissim = 1.0 - dot / denom
        mask_ref[0] = mask
        dissim_ref[0] = dissim
    else:
        # Score-only: approximate reciprocal runs on the otherwise-idle EUP.
        dissim = 1.0 - dot * pl.reciprocal(denom, approx=True)

    # Per-tile partial sums accumulated into the resident output block.
    num = jnp.sum(dissim * mask)
    den = jnp.sum(mask)
    lane = jax.lax.broadcasted_iota(jnp.int32, nd_ref.shape, len(nd_ref.shape) - 1)
    nd_ref[...] += jnp.where(lane == 0, num, jnp.where(lane == 1, den, 0.0))


def met3r_score(rendering_cw, *, tile_h=None, return_maps=True):
    """rendering_cw: (B, 2, H, C, W) rendered feature maps, f32 or bf16
    (channels on sublanes, W on lanes -- the producer contract).

    Returns (score (B,), overlap_mask (B,H,W), feat_dissim_maps (B,H,W)) when
    return_maps=True, else just score (skips the two f32 map writes)."""
    B, K, H, C, W = rendering_cw.shape
    assert K == 2
    itemsize = jnp.dtype(rendering_cw.dtype).itemsize
    vmem_limit = _vmem_limit_bytes()

    # Split H in two so a second "parallel" grid axis exists even at B=1
    # (keeps both v7x TensorCores busy); each half owns its own accumulator.
    ns = 2 if (H % 16 == 0 and H >= 16) else 1
    h_split = H // ns

    if tile_h is None:
        per_row = (2 * (2 * C * W * itemsize)                   # 2x-buffered rendering
                   + (2 * 2 * W * 4 if return_maps else 0)      # 2x-buffered mask+dissim
                   + 4 * C * W * 4)                             # f32 upcast intermediates
        tile_h = _pick_tile(h_split, 8, per_row, int(0.7 * vmem_limit))
    assert h_split % tile_h == 0
    nh = h_split // tile_h

    nd_shape = jax.ShapeDtypeStruct((B, ns, 1, 128), jnp.float32)
    nd_spec = pl.BlockSpec((1, 1, 1, 128), lambda b, s, h: (b, s, 0, 0))
    rend_spec = pl.BlockSpec((1, 2, tile_h, C, W),
                             lambda b, s, h: (b, 0, s * nh + h, 0, 0))

    if return_maps:
        out_shape = (nd_shape,
                     jax.ShapeDtypeStruct((B, H, W), jnp.float32),
                     jax.ShapeDtypeStruct((B, H, W), jnp.float32))
        out_specs = (nd_spec,
                     pl.BlockSpec((1, tile_h, W), lambda b, s, h: (b, s * nh + h, 0)),
                     pl.BlockSpec((1, tile_h, W), lambda b, s, h: (b, s * nh + h, 0)))
    else:
        out_shape = nd_shape
        out_specs = nd_spec

    outs = pl.pallas_call(
        _met3r_kernel,
        out_shape=out_shape,
        grid=(B, ns, nh),
        in_specs=[rend_spec],    # both views in one block: no rendering[:,k] slices
        out_specs=out_specs,
        compiler_params=pltpu.CompilerParams(
            dimension_semantics=("parallel", "parallel", "arbitrary"),
            vmem_limit_bytes=vmem_limit,
        ),
    )(rendering_cw)

    numden = outs[0] if return_maps else outs
    num = numden[:, :, 0, 0].sum(axis=1)      # sum the H-halves in the epilogue
    den = numden[:, :, 0, 1].sum(axis=1)
    score = num / (den + 1e-6)
    if return_maps:
        return score, outs[1], outs[2]
    return score


# ---------------------------------------------------------------------------
# Pure-JAX references (mirror the PyTorch semantics)
# ---------------------------------------------------------------------------
def _canon_ref_cf(ptmps_cf, conf):
    c = conf[:, :, None, :, :] - 0.999
    return (c * ptmps_cf).sum(axis=1) / c.sum(axis=1)            # (B, 3, H, W)


def _met3r_ref(rendering_cl):
    # rendering_cl: (B, 2, H, W, C) channels-last, matching the PyTorch layout.
    rendering = rendering_cl.astype(jnp.float32)
    non_overlap = rendering == BG
    mask = (1.0 - non_overlap.astype(jnp.float32)).prod(axis=-1).prod(axis=1)
    rend = jnp.where(non_overlap, 0.0, rendering)
    r0, r1 = rend[:, 0], rend[:, 1]
    dot = (r1 * r0).sum(-1)
    dissim = 1.0 - dot / (jnp.linalg.norm(r1, axis=-1) * jnp.linalg.norm(r0, axis=-1) + 0.001)
    score = (dissim * mask).sum((-1, -2)) / (mask.sum((-1, -2)) + 1e-6)
    return score, mask, dissim


if __name__ == "__main__":
    key = jax.random.PRNGKey(0)
    B, H, W, C = 2, 32, 128, 128   # real FeatUp dino16 has C=384, spatial 224..512
    k1, k2, k3, k4 = jax.random.split(key, 4)

    # --- synthetic "rendered" feature maps (stand-in for FeatUp features
    #     projected + rasterized by PyTorch3D, which is not translatable) ---
    feats = jax.random.normal(k1, (B, 2, H, W, C), dtype=jnp.float32)
    bg_px = jax.random.uniform(k2, (B, 2, H, W)) < 0.3            # background pixels
    rendering_cl = jnp.where(bg_px[..., None], BG, feats)          # PyTorch (b,k,h,w,c)
    # Kernel layout contract is (B,2,H,C,W); in production the producer emits
    # this directly — the transpose here only builds demo data.
    rendering_cw = jnp.transpose(rendering_cl, (0, 1, 2, 4, 3))

    # --- synthetic point maps / confidences (stand-in for DUSt3R outputs),
    #     produced channels-first so no wrapper-side relayout is needed ---
    ptmps_cf = jax.random.normal(k3, (B, 2, 3, H, W), dtype=jnp.float32)
    conf = 1.0 + jax.nn.softplus(jax.random.normal(k4, (B, 2, H, W), dtype=jnp.float32))

    # Kernel 1: canonical point map (lane-dense flattened spatial, tiled)
    canon = canonical_point_map(ptmps_cf, conf, tile=8)
    canon_ref = _canon_ref_cf(ptmps_cf, conf)

    # Kernel 2: MEt3R score + maps (f32, exact dissim divide, forced multi-tile H)
    score, mask, dissim = met3r_score(rendering_cw, tile_h=8, return_maps=True)
    score_ref, mask_ref, dissim_ref = _met3r_ref(rendering_cl)

    # bf16 score-only path (producer casts the BG-filled f32 map): halves HBM
    # bytes of the bandwidth-bound kernel and skips the two map writes.
    score_bf16 = met3r_score(rendering_cw.astype(jnp.bfloat16), return_maps=False)

    jax.block_until_ready((canon, score, mask, dissim, score_bf16))

    assert jnp.allclose(canon, canon_ref, rtol=1e-5, atol=1e-5)
    assert jnp.allclose(mask, mask_ref, rtol=0.0, atol=1e-6)
    assert jnp.allclose(dissim, dissim_ref, rtol=1e-3, atol=1e-3)
    assert jnp.allclose(score, score_ref, rtol=1e-3, atol=1e-3)
    # bf16 feature quantization + approx reciprocal: loose check on the score.
    assert jnp.allclose(score_bf16, score_ref, rtol=0.0, atol=5e-2)

    # TODO(synk): DUSt3R/MASt3R backbone, FeatUp upsampler, PyTorch3D point
    # rasterization/compositing and nanmedian focal estimation are external
    # pretrained / rasterizer components with no clean Pallas equivalent.
    print("KERNEL_OK")
</pallas_src>

<mosaic_0001>
module attributes {stable_mosaic.version = 11 : i64} {
  func.func @_canon_kernel(%arg0: i32, %arg1: i32, %arg2: memref<1x2x3x8x128xf32, #tpu.memory_space<vmem>>, %arg3: memref<1x2x8x128xf32, #tpu.memory_space<vmem>>, %arg4: memref<1x3x8x128xf32, #tpu.memory_space<vmem>>) attributes {dimension_semantics = [#tpu.dimension_semantics<parallel>, #tpu.dimension_semantics<parallel>], iteration_bounds = array<i64: 2, 4>, scalar_prefetch = 0 : i64, scratch_operands = 0 : i64, tpu.core_type = #tpu.core_type<tc>, window_params = [{transform_indices = @transform_0, window_bounds = array<i64: 1, 2, 3, 8, 128>}, {transform_indices = @transform_1, window_bounds = array<i64: 1, 2, 8, 128>}, {transform_indices = @transform_2, window_bounds = array<i64: 1, 3, 8, 128>}]} {
    %c0 = arith.constant 0 : index
    %c0_0 = arith.constant 0 : index
    %c0_1 = arith.constant 0 : index
    %c0_2 = arith.constant 0 : index
    %0 = vector.load %arg3[%c0, %c0_0, %c0_1, %c0_2] : memref<1x2x8x128xf32, #tpu.memory_space<vmem>>, vector<1x1x8x128xf32>
    %1 = vector.shape_cast %0 : vector<1x1x8x128xf32> to vector<8x128xf32>
    %cst = arith.constant 9.990000e-01 : f32
    %2 = vector.broadcast %cst : f32 to vector<8x128xf32>
    %3 = arith.subf %1, %2 : vector<8x128xf32>
    %c0_3 = arith.constant 0 : index
    %c1 = arith.constant 1 : index
    %c0_4 = arith.constant 0 : index
    %c0_5 = arith.constant 0 : index
    %4 = vector.load %arg3[%c0_3, %c1, %c0_4, %c0_5] : memref<1x2x8x128xf32, #tpu.memory_space<vmem>>, vector<1x1x8x128xf32>
    %5 = vector.shape_cast %4 : vector<1x1x8x128xf32> to vector<8x128xf32>
    %cst_6 = arith.constant 9.990000e-01 : f32
    %6 = vector.broadcast %cst_6 : f32 to vector<8x128xf32>
    %7 = arith.subf %5, %6 : vector<8x128xf32>
    %8 = arith.addf %3, %7 : vector<8x128xf32>
    %cst_7 = arith.constant 1.000000e+00 : f32
    %9 = vector.broadcast %cst_7 : f32 to vector<8x128xf32>
    %10 = arith.divf %9, %8 : vector<8x128xf32>
    %c0_8 = arith.constant 0 : index
    %c0_9 = arith.constant 0 : index
    %c0_10 = arith.constant 0 : index
    %c0_11 = arith.constant 0 : index
    %c0_12 = arith.constant 0 : index
    %11 = vector.load %arg2[%c0_8, %c0_9, %c0_10, %c0_11, %c0_12] : memref<1x2x3x8x128xf32, #tpu.memory_space<vmem>>, vector<1x1x1x8x128xf32>
    %12 = vector.shape_cast %11 : vector<1x1x1x8x128xf32> to vector<8x128xf32>
    %13 = arith.mulf %12, %3 : vector<8x128xf32>
    %c0_13 = arith.constant 0 : index
    %c1_14 = arith.constant 1 : index
    %c0_15 = arith.constant 0 : index
    %c0_16 = arith.constant 0 : index
    %c0_17 = arith.constant 0 : index
    %14 = vector.load %arg2[%c0_13, %c1_14, %c0_15, %c0_16, %c0_17] : memref<1x2x3x8x128xf32, #tpu.memory_space<vmem>>, vector<1x1x1x8x128xf32>
    %15 = vector.shape_cast %14 : vector<1x1x1x8x128xf32> to vector<8x128xf32>
    %16 = arith.mulf %15, %7 : vector<8x128xf32>
    %17 = arith.addf %13, %16 : vector<8x128xf32>
    %18 = arith.mulf %17, %10 : vector<8x128xf32>
    %c0_18 = arith.constant 0 : index
    %c0_19 = arith.constant 0 : index
    %c0_20 = arith.constant 0 : index
    %c0_21 = arith.constant 0 : index
    %19 = vector.load %arg4[%c0_18, %c0_19, %c0_20, %c0_21] : memref<1x3x8x128xf32, #tpu.memory_space<vmem>>, vector<1x1x8x128xf32>
    %20 = vector.shape_cast %19 : vector<1x1x8x128xf32> to vector<8x128xf32>
    %21 = vector.shape_cast %18 : vector<8x128xf32> to vector<1x1x8x128xf32>
    tpu.vector_store %arg4[%c0_18, %c0_19, %c0_20, %c0_21], %21 {strides = array<i32>} : memref<1x3x8x128xf32, #tpu.memory_space<vmem>>, vector<1x1x8x128xf32>,
    %c0_22 = arith.constant 0 : index
    %c0_23 = arith.constant 0 : index
    %c1_24 = arith.constant 1 : index
    %c0_25 = arith.constant 0 : index
    %c0_26 = arith.constant 0 : index
    %22 = vector.load %arg2[%c0_22, %c0_23, %c1_24, %c0_25, %c0_26] : memref<1x2x3x8x128xf32, #tpu.memory_space<vmem>>, vector<1x1x1x8x128xf32>
    %23 = vector.shape_cast %22 : vector<1x1x1x8x128xf32> to vector<8x128xf32>
    %24 = arith.mulf %23, %3 : vector<8x128xf32>
    %c0_27 = arith.constant 0 : index
    %c1_28 = arith.constant 1 : index
    %c1_29 = arith.constant 1 : index
    %c0_30 = arith.constant 0 : index
    %c0_31 = arith.constant 0 : index
    %25 = vector.load %arg2[%c0_27, %c1_28, %c1_29, %c0_30, %c0_31] : memref<1x2x3x8x128xf32, #tpu.memory_space<vmem>>, vector<1x1x1x8x128xf32>
    %26 = vector.shape_cast %25 : vector<1x1x1x8x128xf32> to vector<8x128xf32>
    %27 = arith.mulf %26, %7 : vector<8x128xf32>
    %28 = arith.addf %24, %27 : vector<8x128xf32>
    %29 = arith.mulf %28, %10 : vector<8x128xf32>
    %c0_32 = arith.constant 0 : index
    %c1_33 = arith.constant 1 : index
    %c0_34 = arith.constant 0 : index
    %c0_35 = arith.constant 0 : index
    %30 = vector.load %arg4[%c0_32, %c1_33, %c0_34, %c0_35] : memref<1x3x8x128xf32, #tpu.memory_space<vmem>>, vector<1x1x8x128xf32>
    %31 = vector.shape_cast %30 : vector<1x1x8x128xf32> to vector<8x128xf32>
    %32 = vector.shape_cast %29 : vector<8x128xf32> to vector<1x1x8x128xf32>
    tpu.vector_store %arg4[%c0_32, %c1_33, %c0_34, %c0_35], %32 {strides = array<i32>} : memref<1x3x8x128xf32, #tpu.memory_space<vmem>>, vector<1x1x8x128xf32>,
    %c0_36 = arith.constant 0 : index
    %c0_37 = arith.constant 0 : index
    %c2 = arith.constant 2 : index
    %c0_38 = arith.constant 0 : index
    %c0_39 = arith.constant 0 : index
    %33 = vector.load %arg2[%c0_36, %c0_37, %c2, %c0_38, %c0_39] : memref<1x2x3x8x128xf32, #tpu.memory_space<vmem>>, vector<1x1x1x8x128xf32>
    %34 = vector.shape_cast %33 : vector<1x1x1x8x128xf32> to vector<8x128xf32>
    %35 = arith.mulf %34, %3 : vector<8x128xf32>
    %c0_40 = arith.constant 0 : index
    %c1_41 = arith.constant 1 : index
    %c2_42 = arith.constant 2 : index
    %c0_43 = arith.constant 0 : index
    %c0_44 = arith.constant 0 : index
    %36 = vector.load %arg2[%c0_40, %c1_41, %c2_42, %c0_43, %c0_44] : memref<1x2x3x8x128xf32, #tpu.memory_space<vmem>>, vector<1x1x1x8x128xf32>
    %37 = vector.shape_cast %36 : vector<1x1x1x8x128xf32> to vector<8x128xf32>
    %38 = arith.mulf %37, %7 : vector<8x128xf32>
    %39 = arith.addf %35, %38 : vector<8x128xf32>
    %40 = arith.mulf %39, %10 : vector<8x128xf32>
    %c0_45 = arith.constant 0 : index
    %c2_46 = arith.constant 2 : index
    %c0_47 = arith.constant 0 : index
    %c0_48 = arith.constant 0 : index
    %41 = vector.load %arg4[%c0_45, %c2_46, %c0_47, %c0_48] : memref<1x3x8x128xf32, #tpu.memory_space<vmem>>, vector<1x1x8x128xf32>
    %42 = vector.shape_cast %41 : vector<1x1x8x128xf32> to vector<8x128xf32>
    %43 = vector.shape_cast %40 : vector<8x128xf32> to vector<1x1x8x128xf32>
    tpu.vector_store %arg4[%c0_45, %c2_46, %c0_47, %c0_48], %43 {strides = array<i32>} : memref<1x3x8x128xf32, #tpu.memory_space<vmem>>, vector<1x1x8x128xf32>,
    return
  }
  func.func @transform_0(%arg0: i32, %arg1: i32) -> (i32, i32, i32, i32, i32) {
    %c0_i32 = arith.constant 0 : i32
    %c0_i32_0 = arith.constant 0 : i32
    %c0_i32_1 = arith.constant 0 : i32
    %c0_i32_2 = arith.constant 0 : i32
    return %arg0, %c0_i32, %c0_i32_0, %arg1, %c0_i32_1 : i32, i32, i32, i32, i32
  }
  func.func @transform_1(%arg0: i32, %arg1: i32) -> (i32, i32, i32, i32) {
    %c0_i32 = arith.constant 0 : i32
    %c0_i32_0 = arith.constant 0 : i32
    %c0_i32_1 = arith.constant 0 : i32
    return %arg0, %c0_i32, %arg1, %c0_i32_0 : i32, i32, i32, i32
  }
  func.func @transform_2(%arg0: i32, %arg1: i32) -> (i32, i32, i32, i32) {
    %c0_i32 = arith.constant 0 : i32
    %c0_i32_0 = arith.constant 0 : i32
    %c0_i32_1 = arith.constant 0 : i32
    return %arg0, %c0_i32, %arg1, %c0_i32_0 : i32, i32, i32, i32
  }
}

</mosaic_0001>

<llo_original>
// kernel: tpu_custom_call.1
$region0: #{tpu_custom_call.1}
  #allocation0 [shape = 'u32[]', space=smem, size = 0x4, offset = 0x4, fixed_abs, tag = 'smem constant byte address 0x4 - core index']
  #allocation1 [shape = 'u32[72,128]{1,0:T(1,128)}', space=vmem, size = 0x9000, scoped, tag = 'internal scratch']
  %s0 = inlined_call_operand.hbm [shape: f32[2,2,3,32,128], index: 0, kind: input, shape index: {}]
  %s1 = inlined_call_operand.hbm [shape: f32[2,2,32,128], index: 1, kind: input, shape index: {}]
  %s2 = inlined_call_operand.hbm [shape: f32[2,3,32,128], index: 2, kind: output, shape index: {}]
  %s3 = sld [smem:[#allocation0]]
  $region49: #{tpu_custom_call.1} parent=0
    _
  %s5 = ssub.s32 1, %s3
  %s6 = scalar_select 0, %s5, %s3
  $region1: #{tpu_custom_call.1} parent=0
    #allocation2 [shape = 'u8[49152]{0}', space=vmem, size = 0xc000, scoped, tag = 'input window, operand 0']
    #allocation3 [shape = 's32[2]{0}', space=sflag, size = 0x8, scoped, tag = 'scoped memory for tpu_custom_call.1']
    #allocation4 [shape = 's32[2]{0}', space=sflag, size = 0x8, scoped, tag = 'scoped memory for tpu_custom_call.1']
    #allocation5 [shape = 'u8[16384]{0}', space=vmem, size = 0x4000, scoped, tag = 'input window, operand 1']
    #allocation6 [shape = 's32[2]{0}', space=sflag, size = 0x8, scoped, tag = 'scoped memory for tpu_custom_call.1']
    #allocation7 [shape = 'u8[24576]{0}', space=vmem, size = 0x6000, scoped, tag = 'output window, operand 0']
    %7 = vsyncpa [#allocation3], 0
    %s8 = scalar_lea.sflag [#allocation3], 1
    %9 = vsyncpa %s8, 0
    %10 = vsyncpa [#allocation6], 0
    %s11 = scalar_lea.sflag [#allocation6], 1
    %12 = vsyncpa %s11, 0
    %13 = vsyncpa [#allocation4], 0
    %s14 = scalar_lea.sflag [#allocation4], 1
    %15 = vsyncpa %s14, 0
    loop: start=0, step=1, limit=10
    $region2: #{tpu_custom_call.1} parent=1 // loop_pre_header
      _
    $region3: #{tpu_custom_call.1} parent=1 // loop_header
      %s17 = sphi 0, %s21
      %p18 = scmp.ge.s32.totalorder %s17, 10
      %s24 = sphi 0, %s36
      %s25 = sphi 0, %s32
      %s26 = sphi 0, %s24
      %s27 = sphi 0, %s25
      %s28 = sphi 0, %s26
      %s29 = sphi 0, %s27
      %s41 = sphi 0, %s43
      %s44 = sphi 0, %s41
      %s45 = sphi 0, %s44
      %s61 = sphi 0, %s45
      %s69 = sphi 0, %s71
      %s72 = sphi 0, %s69
      %s73 = sphi 0, %s72
      %s89 = sphi 0, %s73
      %s97 = sphi 0, %s99
      %s100 = sphi 0, %s97
      %s101 = sphi 0, %s100
      %s117 = sphi 0, %s101
    $region4: #{tpu_custom_call.1} parent=1 // loop_header_branch
      %20 = sbr.rel (%p18) target = $region8
    $region5: #{tpu_custom_call.1} parent=1 // loop_body
      %s22 = ssub.s32 %s17, 1
      %s23 = ssub.s32 %s17, 2
      %s30 = sadd.s32 1, %s25
      %p31 = scmp.ge.s32.totalorder %s30, 4
      %s32 = scalar_select %p31, 0, %s30
      %s33 = sadd.s32 1, %s24
      %s34 = scalar_select %p31, %s33, %s24
      %p35 = scmp.ge.s32.totalorder %s34, 2
      %s36 = scalar_select %p35, 0, %s34
      %s37 = ssub.s32 %s24, %s36
      %s38 = ssub.s32 %s25, %s32
      %s39 = sor.u32 %s37, %s38
      %p40 = scmp.eq.s32.totalorder %s39, 0
      %s42 = sadd.s32 %s41, 1
      %s43 = scalar_select %p40, %s41, %s42
      %p46 = pneg %p40
      %p47 = scmp.eq.s32.totalorder %s17, 7
      %p48 = por %p46, %p47
      %p49 = scmp.ne.s32.totalorder %s41, %s44
      %p50 = scmp.eq.s32.totalorder %s17, 0
      %p51 = por %p49, %p50
      %p52 = scmp.ne.s32.totalorder %s41, %s44
      %p53 = scmp.eq.s32.totalorder %s22, 7
      %p54 = por %p52, %p53
      %p55 = scmp.ne.s32.totalorder %s44, %s45
      %p56 = scmp.eq.s32.totalorder %s22, 0
      %p57 = por %p55, %p56
      %p58 = scmp.ne.s32.totalorder %s44, %s45
      %p59 = scmp.eq.s32.totalorder %s23, 7
      %p60 = por %p58, %p59
      %p62 = scmp.ne.s32.totalorder %s45, %s61
      %p63 = scmp.eq.s32.totalorder %s23, 0
      %p64 = por %p62, %p63
      %s65 = ssub.s32 %s24, %s36
      %s66 = ssub.s32 %s25, %s32
      %s67 = sor.u32 %s65, %s66
      %p68 = scmp.eq.s32.totalorder %s67, 0
      %s70 = sadd.s32 %s69, 1
      %s71 = scalar_select %p68, %s69, %s70
      %p74 = pneg %p68
      %p75 = scmp.eq.s32.totalorder %s17, 7
      %p76 = por %p74, %p75
      %p77 = scmp.ne.s32.totalorder %s69, %s72
      %p78 = scmp.eq.s32.totalorder %s17, 0
      %p79 = por %p77, %p78
      %p80 = scmp.ne.s32.totalorder %s69, %s72
      %p81 = scmp.eq.s32.totalorder %s22, 7
      %p82 = por %p80, %p81
      %p83 = scmp.ne.s32.totalorder %s72, %s73
      %p84 = scmp.eq.s32.totalorder %s22, 0
      %p85 = por %p83, %p84
      %p86 = scmp.ne.s32.totalorder %s72, %s73
      %p87 = scmp.eq.s32.totalorder %s23, 7
      %p88 = por %p86, %p87
      %p90 = scmp.ne.s32.totalorder %s73, %s89
      %p91 = scmp.eq.s32.totalorder %s23, 0
      %p92 = por %p90, %p91
      %s93 = ssub.s32 %s24, %s36
      %s94 = ssub.s32 %s25, %s32
      %s95 = sor.u32 %s93, %s94
      %p96 = scmp.eq.s32.totalorder %s95, 0
      %s98 = sadd.s32 %s97, 1
      %s99 = scalar_select %p96, %s97, %s98
      %p102 = pneg %p96
      %p103 = scmp.eq.s32.totalorder %s17, 7
      %p104 = por %p102, %p103
      %p105 = scmp.ne.s32.totalorder %s97, %s100
      %p106 = scmp.eq.s32.totalorder %s17, 0
      %p107 = por %p105, %p106
      %p108 = scmp.ne.s32.totalorder %s97, %s100
      %p109 = scmp.eq.s32.totalorder %s22, 7
      %p110 = por %p108, %p109
      %p111 = scmp.ne.s32.totalorder %s100, %s101
      %p112 = scmp.eq.s32.totalorder %s22, 0
      %p113 = por %p111, %p112
      %p114 = scmp.ne.s32.totalorder %s100, %s101
      %p115 = scmp.eq.s32.totalorder %s23, 7
      %p116 = por %p114, %p115
      %p118 = scmp.ne.s32.totalorder %s101, %s117
      %p119 = scmp.eq.s32.totalorder %s23, 0
      %p120 = por %p118, %p119
      %p121 = scmp.le.s32.totalorder 1, %s17
      %p122 = scmp.lt.s32.totalorder %s17, 9
      %p123 = pnand %p121, %p122
      %p124 = pneg %p123
      // Predicated region
      $region9: #{tpu_custom_call.1} parent=5 // pred_check
        _
      $region10: #{tpu_custom_call.1} parent=5 // pred_check_branch
        %126 = sbr.rel (%p123) target = $region12
      $region11: #{tpu_custom_call.1} parent=5 // pred_region
        %s127 = ssub.s32 %s17, 1
      $region12: #{tpu_custom_call.1} parent=5 // pred_fallthru
        _
      %p128 = scmp.lt.s32.totalorder %s17, 8
      // Predicated region
      $region13: #{tpu_custom_call.1} parent=5 // pred_check
        %p129 = pneg %p128
      $region14: #{tpu_custom_call.1} parent=5 // pred_check_branch
        %131 = sbr.rel (%p129) target = $region16
      $region15: #{tpu_custom_call.1} parent=5 // pred_region
        // Predicated region
        $region17: #{tpu_custom_call.1} parent=15 // pred_check
          %p132 = pneg %p51
        $region18: #{tpu_custom_call.1} parent=15 // pred_check_branch
          %134 = sbr.rel (%p132) target = $region20
        $region19: #{tpu_custom_call.1} parent=15 // pred_region
          %s135 = sand.u32 %s41, 1
          %s136 = scalar_lea.sflag [#allocation3], %s135
          %s137 = sand.u32 %s41, 1
          %s138 = smul.addr %s137, 48
          %s139 = scalar_lea.vmem [#allocation2], %s138
          %141 = vsyncadd %s136, 0
          %s142 = smul.addr %s24, 24
          %s143 = sadd.s32 %s25, %s142
          %s144 = smul.addr %s143, 8
          %s145 = scalar_lea.hbm %s0, %s144
          %s146 = sshll.u32 %s145, 4
          %s147 = int_to_ptr.hbm [resolvable:$true] %s146
          %s148 = sshll.u32 %s139, 4
          %s149 = int_to_ptr.vmem [resolvable:$true] %s148
          %154 = dma.hbm_to_vmem [thread:$0]  %s147, 768, %s149, %s136, 512, 128, 8
        $region20: #{tpu_custom_call.1} parent=15 // pred_fallthru
          _
        // Predicated region
        $region21: #{tpu_custom_call.1} parent=15 // pred_check
          %p155 = pneg %p79
        $region22: #{tpu_custom_call.1} parent=15 // pred_check_branch
          %157 = sbr.rel (%p155) target = $region24
        $region23: #{tpu_custom_call.1} parent=15 // pred_region
          %s158 = sand.u32 %s69, 1
          %s159 = scalar_lea.sflag [#allocation6], %s158
          %s160 = sand.u32 %s69, 1
          %s161 = smul.addr %s160, 16
          %s162 = scalar_lea.vmem [#allocation5], %s161
          %164 = vsyncadd %s159, 0
          %s165 = smul.addr %s24, 8
          %s166 = sadd.s32 %s25, %s165
          %s167 = smul.addr %s166, 8
          %s168 = scalar_lea.hbm %s1, %s167
          %s169 = sshll.u32 %s168, 4
          %s170 = int_to_ptr.hbm [resolvable:$true] %s169
          %s171 = sshll.u32 %s162, 4
          %s172 = int_to_ptr.vmem [resolvable:$true] %s171
          %177 = dma.hbm_to_vmem [thread:$0]  %s170, 256, %s172, %s159, 512, 128, 8
        $region24: #{tpu_custom_call.1} parent=15 // pred_fallthru
          _
      $region16: #{tpu_custom_call.1} parent=5 // pred_fallthru
        _
      %p178 = scmp.le.s32.totalorder 1, %s17
      %p179 = scmp.lt.s32.totalorder %s17, 9
      %p180 = pnand %p178, %p179
      %p181 = pneg %p180
      // Predicated region
      $region25: #{tpu_custom_call.1} parent=5 // pred_check
        _
      $region26: #{tpu_custom_call.1} parent=5 // pred_check_branch
        %183 = sbr.rel (%p180) target = $region28
      $region27: #{tpu_custom_call.1} parent=5 // pred_region
        %s184 = ssub.s32 %s17, 1
        %s185 = sand.u32 %s44, 1
        %s186 = scalar_lea.sflag [#allocation3], %s185
        %s187 = sand.u32 %s44, 1
        %s188 = smul.addr %s187, 48
        %s189 = scalar_lea.vmem [#allocation2], %s188
        // Predicated region
        $region29: #{tpu_custom_call.1} parent=27 // pred_check
          %p190 = pneg %p57
        $region30: #{tpu_custom_call.1} parent=27 // pred_check_branch
          %192 = sbr.rel (%p190) target = $region32
        $region31: #{tpu_custom_call.1} parent=27 // pred_region
          %194 = dma.done %s186, 768
        $region32: #{tpu_custom_call.1} parent=27 // pred_fallthru
          _
        %s195 = sand.u32 %s72, 1
        %s196 = scalar_lea.sflag [#allocation6], %s195
        %s197 = sand.u32 %s72, 1
        %s198 = smul.addr %s197, 16
        %s199 = scalar_lea.vmem [#allocation5], %s198
        // Predicated region
        $region33: #{tpu_custom_call.1} parent=27 // pred_check
          %p200 = pneg %p85
        $region34: #{tpu_custom_call.1} parent=27 // pred_check_branch
          %202 = sbr.rel (%p200) target = $region36
        $region35: #{tpu_custom_call.1} parent=27 // pred_region
          %204 = dma.done %s196, 256
        $region36: #{tpu_custom_call.1} parent=27 // pred_fallthru
          _
        %s205 = sand.u32 %s44, 1
        %s206 = scalar_lea.sflag [#allocation3], %s205
        %s207 = sand.u32 %s44, 1
        %s208 = smul.addr %s207, 48
        %s209 = scalar_lea.vmem [#allocation2], %s208
        %p210 = pneg %p57
        %p211 = pneg %p54
        %s212 = sand.u32 %s72, 1
        %s213 = scalar_lea.sflag [#allocation6], %s212
        %s214 = sand.u32 %s72, 1
        %s215 = smul.addr %s214, 16
        %s216 = scalar_lea.vmem [#allocation5], %s215
        %p217 = pneg %p85
        %p218 = pneg %p82
        %p219 = pneg %p113
        %p220 = pneg %p110
        %s221 = sand.u32 %s100, 1
        %s222 = scalar_lea.sflag [#allocation4], %s221
        %s223 = sand.u32 %s100, 1
        %s224 = smul.addr %s223, 24
        %s225 = scalar_lea.vmem [#allocation7], %s224
        %v226 = vld [vmem:[%s199] sm:$0xff]
        %v227 = vsub.f32 %v226, 0.999
        %s228 = scalar_lea.vmem %s199, 8 [#allocation5]
        %v229 = vld [vmem:[%s228] sm:$0xff]
        %v230 = vsub.f32 %v229, 0.999
        %v231 = vadd.f32 %v227, %v230
        %v232 = vrcp.pop %v231
        %v233 = vmul.f32 %v231, %v232
        %v234 = vsub.f32 1.0, %v233
        %v235 = vmul.f32 %v232, %v234
        %v236 = vadd.f32 %v232, %v235
        %vm237 = vweird.f32 %v231
        %vm238 = vweird.f32 %v232
        %vm239 = vmor %vm237, %vm238
        %v240 = vsel %vm239, %v232, %v236
        %v241 = vand.u32 2147483647, %v231
        %vm242 = vcmp.eq.f32.partialorder %v241, 8.507059e+37
        %v243 = vand.u32 %v231, 2147483648
        %v244 = vor.u32 1.1754944e-38, %v243
        %v245 = vsel %vm242, %v244, %v240
        %v246 = vmul.f32 1.0, %v245
        %v247 = vld [vmem:[%s189] sm:$0xff]
        %v248 = vmul.f32 %v247, %v227
        %s249 = scalar_lea.vmem %s189, 24 [#allocation2]
        %v250 = vld [vmem:[%s249] sm:$0xff]
        %v251 = vmul.f32 %v250, %v230
        %v252 = vadd.f32 %v248, %v251
        %v253 = vmul.f32 %v252, %v246
        %254 = vst [vmem:[%s225] sm:$0xff] %v253
        %s255 = scalar_lea.vmem %s189, 8 [#allocation2]
        %v256 = vld [vmem:[%s255] sm:$0xff]
        %v257 = vmul.f32 %v256, %v227
        %s258 = scalar_lea.vmem %s189, 32 [#allocation2]
        %v259 = vld [vmem:[%s258] sm:$0xff]
        %v260 = vmul.f32 %v259, %v230
        %v261 = vadd.f32 %v257, %v260
        %v262 = vmul.f32 %v261, %v246
        %s263 = scalar_lea.vmem %s225, 8 [#allocation7]
        %264 = vst [vmem:[%s263] sm:$0xff] %v262
        %s265 = scalar_lea.vmem %s189, 16 [#allocation2]
        %v266 = vld [vmem:[%s265] sm:$0xff]
        %v267 = vmul.f32 %v266, %v227
        %s268 = scalar_lea.vmem %s189, 40 [#allocation2]
        %v269 = vld [vmem:[%s268] sm:$0xff]
        %v270 = vmul.f32 %v269, %v230
        %v271 = vadd.f32 %v267, %v270
        %v272 = vmul.f32 %v271, %v246
        %s273 = scalar_lea.vmem %s225, 16 [#allocation7]
        %274 = vst [vmem:[%s273] sm:$0xff] %v272
        %s275 = sand.u32 %s100, 1
        %s276 = scalar_lea.sflag [#allocation4], %s275
        %s277 = sand.u32 %s100, 1
        %s278 = smul.addr %s277, 24
        %s279 = scalar_lea.vmem [#allocation7], %s278
        // Predicated region
        $region37: #{tpu_custom_call.1} parent=27 // pred_check
          %p280 = pneg %p110
        $region38: #{tpu_custom_call.1} parent=27 // pred_check_branch
          %282 = sbr.rel (%p280) target = $region40
        $region39: #{tpu_custom_call.1} parent=27 // pred_region
          %284 = vsyncadd %s276, 0
          %s285 = smul.addr %s26, 12
          %s286 = sadd.s32 %s27, %s285
          %s287 = smul.addr %s286, 8
          %s288 = scalar_lea.hbm %s2, %s287
          %s289 = sshll.u32 %s279, 4
          %s290 = int_to_ptr.vmem [resolvable:$true] %s289
          %s291 = sshll.u32 %s288, 4
          %s292 = int_to_ptr.hbm [resolvable:$true] %s291
          %297 = dma.vmem_to_hbm [thread:$0]  %s290, 384, %s292, %s276, 128, 512, 8
        $region40: #{tpu_custom_call.1} parent=27 // pred_fallthru
          _
      $region28: #{tpu_custom_call.1} parent=5 // pred_fallthru
        _
      %p298 = scmp.le.s32.totalorder 2, %s17
      // Predicated region
      $region41: #{tpu_custom_call.1} parent=5 // pred_check
        %p299 = pneg %p298
      $region42: #{tpu_custom_call.1} parent=5 // pred_check_branch
        %301 = sbr.rel (%p299) target = $region44
      $region43: #{tpu_custom_call.1} parent=5 // pred_region
        %s302 = ssub.s32 %s17, 2
        // Predicated region
        $region45: #{tpu_custom_call.1} parent=43 // pred_check
          %p303 = pneg %p116
        $region46: #{tpu_custom_call.1} parent=43 // pred_check_branch
          %305 = sbr.rel (%p303) target = $region48
        $region47: #{tpu_custom_call.1} parent=43 // pred_region
          %s306 = sand.u32 %s101, 1
          %s307 = scalar_lea.sflag [#allocation4], %s306
          %s308 = sand.u32 %s101, 1
          %s309 = smul.addr %s308, 24
          %s310 = scalar_lea.vmem [#allocation7], %s309
          %312 = dma.done %s307, 384
        $region48: #{tpu_custom_call.1} parent=43 // pred_fallthru
          _
      $region44: #{tpu_custom_call.1} parent=5 // pred_fallthru
        _
    $region6: #{tpu_custom_call.1} parent=1 // loop_footer
      %s21 = sadd.s32 1, %s17
    $region7: #{tpu_custom_call.1} parent=1 // loop_footer_branch
      %16 = sbr.rel target = $region3
    $region8: #{tpu_custom_call.1} parent=1 // loop_exit
      _
    %313 = vsyncpa [#allocation3], 1
    %s314 = scalar_lea.sflag [#allocation3], 1
    %315 = vsyncpa %s314, 1
    %316 = vsyncpa [#allocation6], 1
    %s317 = scalar_lea.sflag [#allocation6], 1
    %318 = vsyncpa %s317, 1
    %319 = vsyncpa [#allocation4], 1
    %s320 = scalar_lea.sflag [#allocation4], 1
    %321 = vsyncpa %s320, 1

</llo_original>
